<compile_context>
chip_gen: v5e
topology: v5e:2x2
jax: 0.10.0
libtpu: 0.0.40
codegen_flags: <defaults>
</compile_context>

<pallas_src>
import functools

import jax
import jax.numpy as jnp
from jax.experimental import pallas as pl
from jax.experimental.pallas import tpu as pltpu

_LANE = 128
_SUBLANE = 8


def _round_up(v, m):
    return ((v + m - 1) // m) * m


def _dec_kernel(x_ref, w_ref, b_ref, ct_ref, cn_ref, out_ref, *, alpha, k_valid):
    """Fused encoder matmul + Student-t soft assignment for one batch tile."""
    x = x_ref[...]            # (TILE_B, D_in)        bf16
    w = w_ref[...]            # (D_in, Dz_pad)        bf16, resident
    bias = b_ref[...]         # (1, Dz_pad)           f32,  resident
    c_t = ct_ref[...]         # (Dz_pad, K_pad)       bf16, resident, = (-2/alpha)*center^T
    c_norms = cn_ref[...]     # (1, K_pad)            f32,  resident, = ||c||^2/alpha (1e30 in pad cols)

    # Encoder: z = x @ W + b   (bf16 operands, f32 accumulation on the MXU)
    z = jnp.dot(x, w, preferred_element_type=jnp.float32) + bias          # (TILE_B, Dz_pad)

    # ||z-c||^2/alpha = ||z||^2/alpha + ||c||^2/alpha - (2/alpha) z.c
    # cross term on the MXU; scale for the cross term is folded into c_t.
    cross = jnp.dot(z.astype(jnp.bfloat16), c_t,
                    preferred_element_type=jnp.float32)                   # (TILE_B, K_pad)
    z_norms = jnp.sum(z * z, axis=1, keepdims=True) * (1.0 / alpha)       # (TILE_B, 1)

    # base = 1 + sq/alpha ; clamp at 1 to absorb cancellation noise.
    # Padded cluster columns: c_norms ~ 1e30 -> base ~ 1e30 -> nom ~ 0.
    base = jnp.maximum(1.0 + z_norms + c_norms + cross, 1.0)

    exponent = -(alpha + 1.0) / 2.0
    if exponent == -1.0:
        nom = pl.reciprocal(base, approx=True)        # alpha == 1 fast path (EUP vrcp)
    else:
        nom = jnp.exp(exponent * jnp.log(base))       # general alpha (EUP exp/log)

    # Exact row normalization (only TILE_B reciprocals -> essentially free),
    # epsilon-clamped so fully-underflowed rows don't produce inf/NaN.
    denom = jnp.maximum(jnp.sum(nom, axis=1, keepdims=True), 1e-30)       # (TILE_B, 1)
    inv_denom = 1.0 / denom                                               # exact f32
    out_ref[...] = (nom * inv_denom)[:, :k_valid]


def dec_forward(x, w, b, center, alpha=1.0, tile_b=None):
    """DEC forward: Linear encoder + Student-t soft cluster assignment."""
    B, D_in = x.shape
    K, D_z = center.shape
    assert w.shape == (D_in, D_z)
    alpha = float(alpha)

    k_pad = _round_up(K, _LANE)     # lane-dense cross matmul / epilogue
    dz_pad = _round_up(D_z, _LANE)  # lane-dense z / contraction dim (zero pad is exact)

    # --- grid-invariant precompute (done once, outside the kernel) ------------
    w_p = w.astype(jnp.bfloat16)
    bias = jnp.reshape(b, (1, D_z)).astype(jnp.float32)
    c_p = center.astype(jnp.float32)
    if dz_pad != D_z:
        w_p = jnp.pad(w_p, ((0, 0), (0, dz_pad - D_z)))
        bias = jnp.pad(bias, ((0, 0), (0, dz_pad - D_z)))
        c_p = jnp.pad(c_p, ((0, 0), (0, dz_pad - D_z)))

    inv_alpha = 1.0 / alpha
    c_t = (jnp.transpose(c_p) * (-2.0 * inv_alpha)).astype(jnp.bfloat16)   # (Dz_pad, K)
    c_norms = jnp.sum(c_p * c_p, axis=1) * inv_alpha                       # (K,)
    if k_pad != K:
        c_t = jnp.pad(c_t, ((0, 0), (0, k_pad - K)))
        # Huge ||c||^2 for padded clusters -> their Student-t weight underflows to 0.
        c_norms = jnp.pad(c_norms, ((0, k_pad - K),), constant_values=1e30)
    c_norms = c_norms[None, :]                                             # (1, K_pad)

    x_bf = x.astype(jnp.bfloat16)   # halves the streamed HBM bytes into the kernel

    # --- chip-aware tile selection --------------------------------------------
    resident_bytes = (w_p.size * 2 + c_t.size * 2 + bias.size * 4 + c_norms.size * 4)
    if tile_b is None:
        try:
            phys_vmem = int(pltpu.get_tpu_info().vmem_capacity_bytes)
        except Exception:
            phys_vmem = 64 * 1024 * 1024            # assume v7x (most constrained)
        vmem_limit = min(phys_vmem * 3 // 4, 100 * 1024 * 1024)
        # Per batch row: double-buffered bf16 x + double-buffered f32 out
        # + f32 intermediates (z, cross/nom and a couple of temps).
        per_row = 2 * 2 * D_in + 2 * 4 * K + 4 * dz_pad + 3 * 4 * k_pad
        budget = max(vmem_limit - resident_bytes - (4 << 20), 1 << 20)
        tile_b = max(_SUBLANE, min(budget // per_row, 1024))
        if B >= 2 * _SUBLANE:
            # Keep at least 2 grid steps: pipeline overlap + megacore sharding.
            tile_b = min(tile_b, _round_up(pl.cdiv(B, 2), _SUBLANE))
    else:
        vmem_limit = 64 * 1024 * 1024
    tile_b = max(_SUBLANE, _round_up(int(tile_b), _SUBLANE))
    tile_b = min(tile_b, _round_up(B, _SUBLANE))
    grid = (pl.cdiv(B, tile_b),)    # partial last block is fine: rows are independent

    # Advisory cost estimate so XLA schedules the call sensibly.
    flops = (2 * B * D_in * dz_pad          # encoder matmul
             + 2 * B * dz_pad * k_pad       # cross matmul
             + 8 * B * k_pad)               # epilogue elementwise
    transcendentals = 2 * B * k_pad
    bytes_accessed = (2 * B * D_in + 4 * B * K
                      + 2 * D_in * dz_pad + 4 * dz_pad
                      + 2 * dz_pad * k_pad + 4 * k_pad)

    vmem_resident_spec = pl.BlockSpec(memory_space=pltpu.MemorySpace.VMEM)

    out = pl.pallas_call(
        functools.partial(_dec_kernel, alpha=alpha, k_valid=K),
        out_shape=jax.ShapeDtypeStruct((B, K), jnp.float32),
        grid_spec=pltpu.PrefetchScalarGridSpec(
            num_scalar_prefetch=0,
            grid=grid,
            in_specs=[
                pl.BlockSpec((tile_b, D_in), lambda i: (i, 0)),   # x: tiled over batch
                vmem_resident_spec,                               # w:        single-buffered resident
                vmem_resident_spec,                               # bias:     single-buffered resident
                vmem_resident_spec,                               # center^T: single-buffered resident
                vmem_resident_spec,                               # ||c||^2:  single-buffered resident
            ],
            out_specs=pl.BlockSpec((tile_b, K), lambda i: (i, 0)),  # true-K output (no padded slab)
        ),
        compiler_params=pltpu.CompilerParams(
            dimension_semantics=("parallel",),       # megacore sharding on v7x
            vmem_limit_bytes=int(vmem_limit),
        ),
        cost_estimate=pl.CostEstimate(
            flops=flops,
            transcendentals=transcendentals,
            bytes_accessed=bytes_accessed,
        ),
    )(x_bf, w_p, bias, c_t, c_norms)

    return out


def dec_reference(x, w, b, center, alpha=1.0):
    """Plain-JAX reference matching the PyTorch semantics (f32)."""
    z = x @ w + jnp.reshape(b, (1, -1))
    sq = jnp.sum((z[:, None, :] - center[None, :, :]) ** 2, axis=2)
    nom = jnp.power(1.0 + sq / alpha, -(alpha + 1.0) / 2.0)
    return nom / jnp.sum(nom, axis=1, keepdims=True)


if __name__ == "__main__":
    B, D_IN, D_Z, K = 8, 32, 16, 4
    ALPHA = 1.0

    key = jax.random.PRNGKey(0)
    kx, kw, kb, kc = jax.random.split(key, 4)

    x = jax.random.normal(kx, (B, D_IN), dtype=jnp.float32)
    # Deterministic synthetic encoder (Linear) params and cluster centers.
    w = jax.random.normal(kw, (D_IN, D_Z), dtype=jnp.float32) * 0.1
    b = jax.random.normal(kb, (1, D_Z), dtype=jnp.float32) * 0.01
    center = jax.random.normal(kc, (K, D_Z), dtype=jnp.float32)

    out = dec_forward(x, w, b, center, alpha=ALPHA)
    out = jax.block_until_ready(out)

    ref = dec_reference(x, w, b, center, alpha=ALPHA)
    assert out.shape == (B, K)
    assert bool(jnp.all(jnp.isfinite(out)))
    # bf16 MXU operands + matmul-identity distances -> ~1e-3 level differences
    # vs. the exact-f32 broadcast reference; still a strong check on [0,1] probs.
    assert jnp.allclose(out, ref, atol=1e-2, rtol=1e-2), float(jnp.max(jnp.abs(out - ref)))
    # Exact row normalization -> rows sum to 1 to f32 rounding.
    assert jnp.allclose(jnp.sum(out, axis=1), jnp.ones((B,)), atol=1e-5)

    print("KERNEL_OK")
</pallas_src>

<mosaic_0001>
module attributes {stable_mosaic.version = 11 : i64} {
  func.func @_dec_kernel(%arg0: i32, %arg1: memref<8x32xbf16, #tpu.memory_space<vmem>>, %arg2: memref<32x128xbf16, #tpu.memory_space<vmem>>, %arg3: memref<1x128xf32, #tpu.memory_space<vmem>>, %arg4: memref<128x128xbf16, #tpu.memory_space<vmem>>, %arg5: memref<1x128xf32, #tpu.memory_space<vmem>>, %arg6: memref<8x4xf32, #tpu.memory_space<vmem>>) attributes {dimension_semantics = [#tpu.dimension_semantics<parallel>], iteration_bounds = array<i64: 1>, scalar_prefetch = 0 : i64, scratch_operands = 0 : i64, tpu.core_type = #tpu.core_type<tc>, window_params = [{transform_indices = @transform_0, window_bounds = array<i64: 8, 32>}, {pipeline_mode = #tpu.pipeline_mode<synchronous>, transform_indices = @transform_1, window_bounds = array<i64: 32, 128>}, {pipeline_mode = #tpu.pipeline_mode<synchronous>, transform_indices = @transform_2, window_bounds = array<i64: 1, 128>}, {pipeline_mode = #tpu.pipeline_mode<synchronous>, transform_indices = @transform_3, window_bounds = array<i64: 128, 128>}, {pipeline_mode = #tpu.pipeline_mode<synchronous>, transform_indices = @transform_4, window_bounds = array<i64: 1, 128>}, {transform_indices = @transform_5, window_bounds = array<i64: 8, 4>}]} {
    %c0 = arith.constant 0 : index
    %c0_0 = arith.constant 0 : index
    %0 = vector.load %arg1[%c0, %c0_0] : memref<8x32xbf16, #tpu.memory_space<vmem>>, vector<8x32xbf16>
    %c0_1 = arith.constant 0 : index
    %c0_2 = arith.constant 0 : index
    %1 = vector.load %arg2[%c0_1, %c0_2] : memref<32x128xbf16, #tpu.memory_space<vmem>>, vector<32x128xbf16>
    %c0_3 = arith.constant 0 : index
    %c0_4 = arith.constant 0 : index
    %2 = vector.load %arg3[%c0_3, %c0_4] : memref<1x128xf32, #tpu.memory_space<vmem>>, vector<1x128xf32>
    %c0_5 = arith.constant 0 : index
    %c0_6 = arith.constant 0 : index
    %3 = vector.load %arg4[%c0_5, %c0_6] : memref<128x128xbf16, #tpu.memory_space<vmem>>, vector<128x128xbf16>
    %c0_7 = arith.constant 0 : index
    %c0_8 = arith.constant 0 : index
    %4 = vector.load %arg5[%c0_7, %c0_8] : memref<1x128xf32, #tpu.memory_space<vmem>>, vector<1x128xf32>
    %cst = arith.constant dense<0.000000e+00> : vector<8x128xf32>
    %5 = tpu.matmul %0, %1, %cst {dimension_numbers = #tpu.dot_dimension_numbers<[1], [0], [0], [1], [0, 0, 1, 1], [], []>} : vector<8x32xbf16>, vector<32x128xbf16>, vector<8x128xf32> -> vector<8x128xf32>
    %6 = vector.broadcast %2 : vector<1x128xf32> to vector<8x128xf32>
    %7 = arith.addf %5, %6 : vector<8x128xf32>
    %8 = arith.truncf %7 : vector<8x128xf32> to vector<8x128xbf16>
    %cst_9 = arith.constant dense<0.000000e+00> : vector<8x128xf32>
    %9 = tpu.matmul %8, %3, %cst_9 {dimension_numbers = #tpu.dot_dimension_numbers<[1], [0], [0], [1], [0, 0, 1, 1], [], []>} : vector<8x128xbf16>, vector<128x128xbf16>, vector<8x128xf32> -> vector<8x128xf32>
    %10 = arith.mulf %7, %7 : vector<8x128xf32>
    %cst_10 = arith.constant dense<0.000000e+00> : vector<8xf32>
    %11 = vector.multi_reduction <add>, %10, %cst_10 [1] : vector<8x128xf32> to vector<8xf32>
    %12 = vector.shape_cast %11 : vector<8xf32> to vector<8x1xf32>
    %cst_11 = arith.constant 1.000000e+00 : f32
    %13 = vector.broadcast %cst_11 : f32 to vector<8x1xf32>
    %14 = arith.mulf %12, %13 : vector<8x1xf32>
    %cst_12 = arith.constant 1.000000e+00 : f32
    %15 = vector.broadcast %cst_12 : f32 to vector<8x1xf32>
    %16 = arith.addf %15, %14 : vector<8x1xf32>
    %17 = vector.broadcast %16 : vector<8x1xf32> to vector<8x128xf32>
    %18 = vector.broadcast %4 : vector<1x128xf32> to vector<8x128xf32>
    %19 = arith.addf %17, %18 : vector<8x128xf32>
    %20 = arith.addf %19, %9 : vector<8x128xf32>
    %cst_13 = arith.constant 1.000000e+00 : f32
    %21 = vector.broadcast %cst_13 : f32 to vector<8x128xf32>
    %22 = arith.maximumf %20, %21 : vector<8x128xf32>
    %23 = tpu.reciprocal %22 {approx = true} : vector<8x128xf32> -> vector<8x128xf32>
    %cst_14 = arith.constant dense<0.000000e+00> : vector<8xf32>
    %24 = vector.multi_reduction <add>, %23, %cst_14 [1] : vector<8x128xf32> to vector<8xf32>
    %25 = vector.shape_cast %24 : vector<8xf32> to vector<8x1xf32>
    %cst_15 = arith.constant 1.000000e-30 : f32
    %26 = vector.broadcast %cst_15 : f32 to vector<8x1xf32>
    %27 = arith.maximumf %25, %26 : vector<8x1xf32>
    %cst_16 = arith.constant 1.000000e+00 : f32
    %28 = vector.broadcast %cst_16 : f32 to vector<8x1xf32>
    %29 = arith.divf %28, %27 : vector<8x1xf32>
    %30 = vector.broadcast %29 : vector<8x1xf32> to vector<8x128xf32>
    %31 = arith.mulf %23, %30 : vector<8x128xf32>
    %32 = vector.extract_strided_slice %31 {offsets = [0, 0], sizes = [8, 4], strides = [1, 1]} : vector<8x128xf32> to vector<8x4xf32>
    %c0_17 = arith.constant 0 : index
    %c0_18 = arith.constant 0 : index
    %33 = vector.load %arg6[%c0_17, %c0_18] : memref<8x4xf32, #tpu.memory_space<vmem>>, vector<8x4xf32>
    tpu.vector_store %arg6[%c0_17, %c0_18], %32 {strides = array<i32>} : memref<8x4xf32, #tpu.memory_space<vmem>>, vector<8x4xf32>,
    return
  }
  func.func @transform_0(%arg0: i32) -> (i32, i32) {
    %c0_i32 = arith.constant 0 : i32
    %c0_i32_0 = arith.constant 0 : i32
    return %arg0, %c0_i32 : i32, i32
  }
  func.func @transform_1(%arg0: i32) -> (i32, i32) {
    %c0_i32 = arith.constant 0 : i32
    %c0_i32_0 = arith.constant 0 : i32
    %c0_i32_1 = arith.constant 0 : i32
    return %c0_i32, %c0_i32_0 : i32, i32
  }
  func.func @transform_2(%arg0: i32) -> (i32, i32) {
    %c0_i32 = arith.constant 0 : i32
    %c0_i32_0 = arith.constant 0 : i32
    %c0_i32_1 = arith.constant 0 : i32
    return %c0_i32, %c0_i32_0 : i32, i32
  }
  func.func @transform_3(%arg0: i32) -> (i32, i32) {
    %c0_i32 = arith.constant 0 : i32
    %c0_i32_0 = arith.constant 0 : i32
    %c0_i32_1 = arith.constant 0 : i32
    return %c0_i32, %c0_i32_0 : i32, i32
  }
  func.func @transform_4(%arg0: i32) -> (i32, i32) {
    %c0_i32 = arith.constant 0 : i32
    %c0_i32_0 = arith.constant 0 : i32
    %c0_i32_1 = arith.constant 0 : i32
    return %c0_i32, %c0_i32_0 : i32, i32
  }
  func.func @transform_5(%arg0: i32) -> (i32, i32) {
    %c0_i32 = arith.constant 0 : i32
    %c0_i32_0 = arith.constant 0 : i32
    return %arg0, %c0_i32 : i32, i32
  }
}

</mosaic_0001>

<llo_original>
// kernel: tpu_custom_call.1
$region0: #{tpu_custom_call.1}
  #allocation0 [shape = 'u32[]', space=smem, size = 0x4, offset = 0x4, fixed_abs, tag = 'smem constant byte address 0x4 - core index']
  #allocation1 [shape = 'u32[72,128]{1,0:T(1,128)}', space=vmem, size = 0x9000, scoped, tag = 'internal scratch']
  %s0 = inlined_call_operand.hbm [shape: bf16[8,32], index: 0, kind: input, shape index: {}]
  %s1 = inlined_call_operand.hbm [shape: bf16[32,128], index: 1, kind: input, shape index: {}]
  %s2 = inlined_call_operand.vmem [shape: f32[1,128], index: 2, kind: input, shape index: {}]
  %s3 = inlined_call_operand.hbm [shape: bf16[128,128], index: 3, kind: input, shape index: {}]
  %s4 = inlined_call_operand.vmem [shape: f32[1,128], index: 4, kind: input, shape index: {}]
  %s5 = inlined_call_operand.vmem [shape: f32[8,4], index: 5, kind: output, shape index: {}]
  %s6 = sld [smem:[#allocation0]]
  $region42: #{tpu_custom_call.1} parent=0
    _
  %s8 = ssub.s32 1, %s6
  %s9 = scalar_select 0, %s8, %s6
  $region1: #{tpu_custom_call.1} parent=0
    #allocation2 [shape = 'u8[2048]{0}', space=vmem, size = 0x800, scoped, tag = 'input window, operand 0, single buffered']
    #allocation3 [shape = 's32[1]{0}', space=sflag, size = 0x4, scoped, tag = 'scoped memory for tpu_custom_call.1']
    #allocation4 [shape = 'u8[8192]{0}', space=vmem, size = 0x2000, scoped, tag = 'input window, operand 1, single buffered']
    #allocation5 [shape = 's32[1]{0}', space=sflag, size = 0x4, scoped, tag = 'scoped memory for tpu_custom_call.1']
    #allocation6 [shape = 'u8[32768]{0}', space=vmem, size = 0x8000, scoped, tag = 'input window, operand 3, single buffered']
    %10 = vsyncpa [#allocation3], 0
    %11 = vsyncpa [#allocation5], 0
    // Predicated region
    $region2: #{tpu_custom_call.1} parent=1 // pred_check
      _
    $region3: #{tpu_custom_call.1} parent=1 // pred_check_branch
      %13 = sbr.rel (0) target = $region5
    $region4: #{tpu_custom_call.1} parent=1 // pred_region
      %15 = vsyncadd [#allocation3], 0
      %s17 = sshll.u32 %s0, 4
      %s18 = int_to_ptr.hbm [resolvable:$true] %s17
      %s19 = sshll.u32 [#allocation2], 4
      %s20 = int_to_ptr.vmem [resolvable:$true] %s19
      %22 = dma.hbm_to_vmem [thread:$0]  %s18, 64, %s20, [#allocation3]
    $region5: #{tpu_custom_call.1} parent=1 // pred_fallthru
      _
    // Predicated region
    $region6: #{tpu_custom_call.1} parent=1 // pred_check
      _
    $region7: #{tpu_custom_call.1} parent=1 // pred_check_branch
      %24 = sbr.rel (0) target = $region9
    $region8: #{tpu_custom_call.1} parent=1 // pred_region
      %26 = vsyncadd [#allocation5], 0
      %s27 = sshll.u32 %s1, 4
      %s28 = int_to_ptr.hbm [resolvable:$true] %s27
      %s29 = sshll.u32 [#allocation4], 4
      %s30 = int_to_ptr.vmem [resolvable:$true] %s29
      %35 = dma.hbm_to_vmem [thread:$0]  %s28, 256, %s30, [#allocation5], 64, 64, 4
    $region9: #{tpu_custom_call.1} parent=1 // pred_fallthru
      _
    // Predicated region
    $region10: #{tpu_custom_call.1} parent=1 // pred_check
      _
    $region11: #{tpu_custom_call.1} parent=1 // pred_check_branch
      %37 = sbr.rel (0) target = $region13
    $region12: #{tpu_custom_call.1} parent=1 // pred_region
      _
    $region13: #{tpu_custom_call.1} parent=1 // pred_fallthru
      _
    // Predicated region
    $region14: #{tpu_custom_call.1} parent=1 // pred_check
      _
    $region15: #{tpu_custom_call.1} parent=1 // pred_check_branch
      %39 = sbr.rel (0) target = $region17
    $region16: #{tpu_custom_call.1} parent=1 // pred_region
      %41 = vsyncadd [#allocation5], 0
      %s42 = sshll.u32 %s3, 4
      %s43 = int_to_ptr.hbm [resolvable:$true] %s42
      %s44 = sshll.u32 [#allocation6], 4
      %s45 = int_to_ptr.vmem [resolvable:$true] %s44
      %50 = dma.hbm_to_vmem [thread:$0]  %s43, 1024, %s45, [#allocation5], 64, 64, 4
    $region17: #{tpu_custom_call.1} parent=1 // pred_fallthru
      _
    // Predicated region
    $region18: #{tpu_custom_call.1} parent=1 // pred_check
      _
    $region19: #{tpu_custom_call.1} parent=1 // pred_check_branch
      %52 = sbr.rel (0) target = $region21
    $region20: #{tpu_custom_call.1} parent=1 // pred_region
      _
    $region21: #{tpu_custom_call.1} parent=1 // pred_fallthru
      _
    // Predicated region
    $region22: #{tpu_custom_call.1} parent=1 // pred_check
      _
    $region23: #{tpu_custom_call.1} parent=1 // pred_check_branch
      %54 = sbr.rel (0) target = $region25
    $region24: #{tpu_custom_call.1} parent=1 // pred_region
      %56 = dma.done [#allocation3], 64
    $region25: #{tpu_custom_call.1} parent=1 // pred_fallthru
      _
    // Predicated region
    $region26: #{tpu_custom_call.1} parent=1 // pred_check
      _
    $region27: #{tpu_custom_call.1} parent=1 // pred_check_branch
      %58 = sbr.rel (0) target = $region29
    $region28: #{tpu_custom_call.1} parent=1 // pred_region
      %60 = dma.done [#allocation5], 256
    $region29: #{tpu_custom_call.1} parent=1 // pred_fallthru
      _
    // Predicated region
    $region30: #{tpu_custom_call.1} parent=1 // pred_check
      _
    $region31: #{tpu_custom_call.1} parent=1 // pred_check_branch
      %62 = sbr.rel (0) target = $region33
    $region32: #{tpu_custom_call.1} parent=1 // pred_region
      %64 = dma.done [#allocation5], 1024
    $region33: #{tpu_custom_call.1} parent=1 // pred_fallthru
      _
    %v66 = vld [vmem:[#allocation2] sm:$0xf]
    %v67 = vld [vmem:[#allocation4] sm:$0xf]
    %v68 = vld [vmem:[#allocation4 + $0x4] sm:$0xf]
    %v69 = vld [vmem:[#allocation4 + $0x8] sm:$0xf]
    %v70 = vld [vmem:[#allocation4 + $0xc] sm:$0xf]
    %v71 = vld [vmem:[%s2] sm:$0x1]
    %v72 = vld [vmem:[#allocation6] sm:$0xf]
    %v73 = vld [vmem:[#allocation6 + $0x4] sm:$0xf]
    %v74 = vld [vmem:[#allocation6 + $0x8] sm:$0xf]
    %v75 = vld [vmem:[#allocation6 + $0xc] sm:$0xf]
    %v76 = vld [vmem:[#allocation6 + $0x10] sm:$0xf]
    %v77 = vld [vmem:[#allocation6 + $0x14] sm:$0xf]
    %v78 = vld [vmem:[#allocation6 + $0x18] sm:$0xf]
    %v79 = vld [vmem:[#allocation6 + $0x1c] sm:$0xf]
    %v80 = vld [vmem:[#allocation6 + $0x20] sm:$0xf]
    %v81 = vld [vmem:[#allocation6 + $0x24] sm:$0xf]
    %v82 = vld [vmem:[#allocation6 + $0x28] sm:$0xf]
    %v83 = vld [vmem:[#allocation6 + $0x2c] sm:$0xf]
    %v84 = vld [vmem:[#allocation6 + $0x30] sm:$0xf]
    %v85 = vld [vmem:[#allocation6 + $0x34] sm:$0xf]
    %v86 = vld [vmem:[#allocation6 + $0x38] sm:$0xf]
    %v87 = vld [vmem:[#allocation6 + $0x3c] sm:$0xf]
    %v88 = vld [vmem:[%s4] sm:$0x1]
    %v90 = vperm.slane %v71, 0
    %v96 = vunpack.c.l.b16 %v67
    %v97 = vunpack.c.l.b16 %v68
    %v98 = vunpack.c.l.b16 %v69
    %v99 = vunpack.c.l.b16 %v70
    %v100 = vpack.c.b16 %v97, %v96
    %v101 = vpack.c.b16 %v99, %v98
    %vm104 = vcmask 261120
    %v106 = vsel %vm104, %v66, 0
    %108 = vmatpush.bf16.msra.mxu0 0
    %109 = vmatpush.bf16.msra.mxu0 0
    %110 = vmatpush.bf16.msra.mxu0 0
    %111 = vmatpush.bf16.msra.mxu0 0
    %112 = vmatpush.bf16.msra.mxu0 0
    %113 = vmatpush.bf16.msra.mxu0 0
    %114 = vmatpush.bf16.msra.mxu0 %v101
    %115 = vmatpush.bf16.msra.mxu0 %v100
    %116 = vmatmul.bf16.gmra.mxu0 %v106
    %v117 = vpop.f32.mrf.mxu0
    %v118 = vadd.f32 %v90, %v117
    %v119 = vpop.f32.mrf.mxu0
    %120 = vdwg.mxu0
    %v121 = vpack.c.bf16 %v118, %v118
    %v138 = vunpack.c.l.b16 %v72
    %v139 = vunpack.c.l.b16 %v73
    %v140 = vunpack.c.l.b16 %v74
    %v141 = vunpack.c.l.b16 %v75
    %v142 = vunpack.c.l.b16 %v76
    %v143 = vunpack.c.l.b16 %v77
    %v144 = vunpack.c.l.b16 %v78
    %v145 = vunpack.c.l.b16 %v79
    %v146 = vunpack.c.l.b16 %v80
    %v147 = vunpack.c.l.b16 %v81
    %v148 = vunpack.c.l.b16 %v82
    %v149 = vunpack.c.l.b16 %v83
    %v150 = vunpack.c.l.b16 %v84
    %v151 = vunpack.c.l.b16 %v85
    %v152 = vunpack.c.l.b16 %v86
    %v153 = vunpack.c.l.b16 %v87
    %v154 = vpack.c.b16 %v139, %v138
    %v155 = vpack.c.b16 %v141, %v140
    %v156 = vpack.c.b16 %v143, %v142
    %v157 = vpack.c.b16 %v145, %v144
    %v158 = vpack.c.b16 %v147, %v146
    %v159 = vpack.c.b16 %v149, %v148
    %v160 = vpack.c.b16 %v151, %v150
    %v161 = vpack.c.b16 %v153, %v152
    %170 = vmatpush.bf16.msra.mxu0 %v161
    %171 = vmatpush.bf16.msra.mxu0 %v160
    %172 = vmatpush.bf16.msra.mxu0 %v159
    %173 = vmatpush.bf16.msra.mxu0 %v158
    %174 = vmatpush.bf16.msra.mxu0 %v157
    %175 = vmatpush.bf16.msra.mxu0 %v156
    %176 = vmatpush.bf16.msra.mxu0 %v155
    %177 = vmatpush.bf16.msra.mxu0 %v154
    %178 = vmatmul.bf16.gmra.mxu0 %v121
    %v179 = vpop.f32.mrf.mxu0
    %v180 = vadd.f32 0.0, %v179
    %v181 = vpop.f32.mrf.mxu0
    %182 = vdwg.mxu0
    %v183 = vmul.f32 %v118, %v118
    %184 = vadd.xlane.f32.xlu0 %v183
    %v185 = vpop.xlane.xlu0 %184
    %v186 = vadd.f32 %v185, 1.0
    %v188 = vperm.slane %v88, 0
    %v190 = vadd.f32 %v186, %v188
    %v191 = vadd.f32 %v190, %v180
    %v192 = vmax.f32 %v191, 1.0
    %v193 = vrcp.pop %v192
    %194 = vadd.xlane.f32.xlu0 %v193
    %v195 = vpop.xlane.xlu0 %194
    %v196 = vmax.f32 %v195, 1e-30
    %v197 = vrcp.pop %v196
    %v198 = vmul.f32 %v196, %v197
    %v199 = vsub.f32 1.0, %v198
    %v200 = vmul.f32 %v197, %v199
    %v201 = vadd.f32 %v197, %v200
    %vm202 = vweird.f32 %v196
    %vm203 = vweird.f32 %v197
    %vm204 = vmor %vm202, %vm203
    %v205 = vsel %vm204, %v197, %v201
    %v206 = vand.u32 2147483647, %v196
    %vm207 = vcmp.eq.f32.partialorder %v206, 8.507059e+37
    %v208 = vand.u32 %v196, 2147483648
    %v209 = vor.u32 1.1754944e-38, %v208
    %v210 = vsel %vm207, %v209, %v205
    %v211 = vmul.f32 1.0, %v210
    %v212 = vmul.f32 %v193, %v211
    %vm213 = vcmask 31744
    %214 = vst.msk [vmem:[%s5] sm:$0xff] %vm213, %v212
    // Predicated region
    $region34: #{tpu_custom_call.1} parent=1 // pred_check
      _
    $region35: #{tpu_custom_call.1} parent=1 // pred_check_branch
      %216 = sbr.rel (0) target = $region37
    $region36: #{tpu_custom_call.1} parent=1 // pred_region
      _
    $region37: #{tpu_custom_call.1} parent=1 // pred_fallthru
      _
    // Predicated region
    $region38: #{tpu_custom_call.1} parent=1 // pred_check
      _
    $region39: #{tpu_custom_call.1} parent=1 // pred_check_branch
      %218 = sbr.rel (0) target = $region41
    $region40: #{tpu_custom_call.1} parent=1 // pred_region
      _
    $region41: #{tpu_custom_call.1} parent=1 // pred_fallthru
      _
    %219 = vsyncpa [#allocation3], 1
    %220 = vsyncpa [#allocation5], 1

</llo_original>
